<compile_context>
chip_gen: v5e
topology: v5e:2x2
jax: 0.10.0
libtpu: 0.0.40
codegen_flags: <defaults>
</compile_context>

<pallas_src>
import functools

import jax
import jax.numpy as jnp
from jax.experimental import pallas as pl
from jax.experimental.pallas import tpu as pltpu


_PAD_MODE = {"zeros": "constant", "reflect": "reflect",
             "replicate": "edge", "circular": "wrap"}


def _round_up(x, m):
    return ((x + m - 1) // m) * m


def _conv_mm_kernel(p_ref, w_ref, b_ref, o_ref):
    # p_ref: (CKKp, lane_tile)  bf16 im2col patches (lane axis = batch*spatial)
    # w_ref: (Cop, CKKp)        bf16
    # b_ref: (Cop, 1)           f32
    # o_ref: (Cop, lane_tile)   f32  (lane-dense store)
    acc = jnp.dot(w_ref[...], p_ref[...],
                  preferred_element_type=jnp.float32)        # (Cop, lane_tile)
    o_ref[...] = (acc + b_ref[...]).astype(o_ref.dtype)


def conv2d_pallas(x_nchw, w_oihw, bias, *, stride, padding, pad_type="zeros"):
    """2D conv (NCHW / OIHW), zero/reflect/replicate/circular padding."""
    N, C_in, H, W = x_nchw.shape
    C_out, _, K, _ = w_oihw.shape
    Ho = (H + 2 * padding - K) // stride + 1
    Wo = (W + 2 * padding - K) // stride + 1
    out_dtype = x_nchw.dtype

    # Degenerate channel-count guards (alpha_in/alpha_out can zero a branch).
    if C_out == 0:
        return jnp.zeros((N, 0, Ho, Wo), out_dtype)
    if C_in == 0:
        return jnp.broadcast_to(
            bias.reshape(1, C_out, 1, 1).astype(out_dtype), (N, C_out, Ho, Wo))

    CKK = C_in * K * K
    HWo = Ho * Wo
    L = N * HWo                                              # lanes (batch folded in)

    # ---- XLA glue: bf16 im2col, batch folded into the lane axis ------------
    xb = x_nchw.astype(jnp.bfloat16)                         # halve glue HBM traffic
    if padding > 0:
        xb = jnp.pad(xb, ((0, 0), (0, 0), (padding, padding), (padding, padding)),
                     mode=_PAD_MODE[pad_type])
    cols = []
    for ky in range(K):
        for kx in range(K):
            cols.append(xb[:, :,
                           ky:ky + stride * Ho:stride,
                           kx:kx + stride * Wo:stride])
    patches = jnp.stack(cols, axis=2)                        # (N, C_in, K*K, Ho, Wo)
    patches = patches.reshape(N, CKK, HWo)
    patches = patches.transpose(1, 0, 2).reshape(CKK, L)     # (CKK, N*HWo) lane-dense

    # ---- Tile-aligned padding ----------------------------------------------
    CKKp = _round_up(CKK, 16)                                # bf16 sublane tile
    Cop = _round_up(C_out, 8)                                # f32 sublane tile

    # Lane-tile budget: double-buffered bf16 patch tile + f32 output tile must
    # fit ~24 MiB so v7x (64 MiB/TC) keeps headroom; v5e/v6e trivially fit.
    per_lane_bytes = 2 * (CKKp * 2) + 2 * (Cop * 4)
    vmem_budget = 24 * 1024 * 1024
    lane_cap = max(128, (vmem_budget // per_lane_bytes) // 128 * 128)

    Lp0 = _round_up(L, 128)
    lane_tile = min(Lp0, 4096, lane_cap)
    # Prefer >=2 parallel grid steps when there is enough work (v7x megacore).
    if Lp0 >= 256 and Lp0 // lane_tile < 2:
        lane_tile = max(128, _round_up(Lp0 // 2, 128))
    Lp = _round_up(Lp0, lane_tile)
    num_tiles = Lp // lane_tile

    patches_p = jnp.pad(patches, ((0, CKKp - CKK), (0, Lp - L)))
    w2d = jnp.pad(w_oihw.reshape(C_out, CKK).astype(jnp.bfloat16),
                  ((0, Cop - C_out), (0, CKKp - CKK)))
    b2d = jnp.pad(bias.astype(jnp.float32).reshape(C_out, 1),
                  ((0, Cop - C_out), (0, 0)))

    cost = pl.CostEstimate(
        flops=2 * Cop * CKKp * Lp,
        transcendentals=0,
        bytes_accessed=(CKKp * Lp * 2 + Cop * CKKp * 2 + Cop * 4 + Cop * Lp * 4))

    out = pl.pallas_call(
        _conv_mm_kernel,
        out_shape=jax.ShapeDtypeStruct((Cop, Lp), jnp.float32),
        grid_spec=pltpu.PrefetchScalarGridSpec(
            num_scalar_prefetch=0,
            grid=(num_tiles,),
            in_specs=[
                pl.BlockSpec((CKKp, lane_tile), lambda i: (0, i)),
                pl.BlockSpec((Cop, CKKp), lambda i: (0, 0)),
                pl.BlockSpec((Cop, 1), lambda i: (0, 0)),
            ],
            out_specs=pl.BlockSpec((Cop, lane_tile), lambda i: (0, i)),
        ),
        compiler_params=pltpu.CompilerParams(
            dimension_semantics=("parallel",),
            vmem_limit_bytes=40 * 1024 * 1024),
        cost_estimate=cost,
    )(patches_p, w2d, b2d)

    out = out[:C_out, :L]                                    # drop alignment padding
    out = out.reshape(C_out, N, Ho, Wo).transpose(1, 0, 2, 3)
    return out.astype(out_dtype)


@functools.partial(jax.jit, static_argnames=("stride", "padding", "pad_type"))
def _octconv_aftup_forward(hf, lf, w_h, b_h, w_l, b_l, *, stride, padding,
                           pad_type):
    hf_out = conv2d_pallas(hf, w_h, b_h, stride=stride, padding=padding,
                           pad_type=pad_type)
    lf_out = conv2d_pallas(lf, w_l, b_l, stride=stride, padding=padding,
                           pad_type=pad_type)
    return hf_out, lf_out


class OctConvAftupPallas:
    """JAX/Pallas port of Oct_Conv_aftup (two independent Conv2d layers)."""

    def __init__(self, in_channels, out_channels, kernel_size, stride, padding,
                 pad_type, alpha_in, alpha_out, key):
        assert pad_type in _PAD_MODE, f"unsupported pad_type {pad_type}"
        lf_in = int(in_channels * alpha_in)
        lf_out = int(out_channels * alpha_out)
        hf_in = in_channels - lf_in
        hf_out = out_channels - lf_out
        self.stride = stride
        self.padding = padding
        self.pad_type = pad_type

        kh_w, kh_b, kl_w, kl_b = jax.random.split(key, 4)
        # PyTorch Conv2d default init: U(-s, s), s = 1/sqrt(fan_in)
        s_h = 1.0 / max(hf_in * kernel_size * kernel_size, 1) ** 0.5
        s_l = 1.0 / max(lf_in * kernel_size * kernel_size, 1) ** 0.5
        # weights stored OIHW (PyTorch layout); kernel consumes the 2D reshape.
        self.w_h = jax.random.uniform(
            kh_w, (hf_out, hf_in, kernel_size, kernel_size),
            minval=-s_h, maxval=s_h, dtype=jnp.float32)
        self.b_h = jax.random.uniform(
            kh_b, (hf_out,), minval=-s_h, maxval=s_h, dtype=jnp.float32)
        self.w_l = jax.random.uniform(
            kl_w, (lf_out, lf_in, kernel_size, kernel_size),
            minval=-s_l, maxval=s_l, dtype=jnp.float32)
        self.b_l = jax.random.uniform(
            kl_b, (lf_out,), minval=-s_l, maxval=s_l, dtype=jnp.float32)

    def __call__(self, x):
        hf, lf = x  # NCHW, matching the PyTorch module's interface
        return _octconv_aftup_forward(
            hf, lf, self.w_h, self.b_h, self.w_l, self.b_l,
            stride=self.stride, padding=self.padding, pad_type=self.pad_type)


def _conv_ref_nchw(x, w, b, *, stride, padding):
    out = jax.lax.conv_general_dilated(
        x, w, window_strides=(stride, stride),
        padding=[(padding, padding), (padding, padding)],
        dimension_numbers=("NCHW", "OIHW", "NCHW"))
    return out + b.reshape(1, -1, 1, 1)


if __name__ == "__main__":
    key = jax.random.PRNGKey(0)
    k_mod, k_hf, k_lf = jax.random.split(key, 3)

    in_channels, out_channels = 8, 8
    alpha_in = alpha_out = 0.5
    kernel_size, stride, padding = 3, 1, 1
    pad_type = "zeros"

    mod = OctConvAftupPallas(in_channels, out_channels, kernel_size, stride,
                             padding, pad_type, alpha_in, alpha_out, k_mod)

    # hf at full resolution, lf at half resolution (octave convention), NCHW.
    N = 2
    hf_c = in_channels - int(in_channels * alpha_in)
    lf_c = int(in_channels * alpha_in)
    hf = jax.random.normal(k_hf, (N, hf_c, 16, 16), dtype=jnp.float32)
    lf = jax.random.normal(k_lf, (N, lf_c, 8, 8), dtype=jnp.float32)

    hf_out, lf_out = mod((hf, lf))
    jax.block_until_ready((hf_out, lf_out))

    assert hf_out.shape == (N, out_channels - int(out_channels * alpha_out), 16, 16)
    assert lf_out.shape == (N, int(out_channels * alpha_out), 8, 8)

    def _bf16_round(a):
        return a.astype(jnp.bfloat16).astype(jnp.float32)

    # Strict check: reference with the same bf16 input/weight rounding the
    # kernel applies (f32 accumulate in both) -> should match very tightly.
    hf_ref_b = _conv_ref_nchw(_bf16_round(hf), _bf16_round(mod.w_h), mod.b_h,
                              stride=stride, padding=padding)
    lf_ref_b = _conv_ref_nchw(_bf16_round(lf), _bf16_round(mod.w_l), mod.b_l,
                              stride=stride, padding=padding)
    assert jnp.allclose(hf_out, hf_ref_b, atol=1e-3), "hf mismatch (bf16 ref)"
    assert jnp.allclose(lf_out, lf_ref_b, atol=1e-3), "lf mismatch (bf16 ref)"

    # Loose check against the pure-f32 reference (bf16 MXU inputs -> ~1e-2).
    hf_ref = _conv_ref_nchw(hf, mod.w_h, mod.b_h, stride=stride, padding=padding)
    lf_ref = _conv_ref_nchw(lf, mod.w_l, mod.b_l, stride=stride, padding=padding)
    assert jnp.allclose(hf_out, hf_ref, atol=5e-2), "hf mismatch (f32 ref)"
    assert jnp.allclose(lf_out, lf_ref, atol=5e-2), "lf mismatch (f32 ref)"

    print("KERNEL_OK")
</pallas_src>

<mosaic_0001>
module attributes {stable_mosaic.version = 11 : i64} {
  func.func @_conv_mm_kernel(%arg0: i32, %arg1: memref<48x256xbf16, #tpu.memory_space<vmem>>, %arg2: memref<8x48xbf16, #tpu.memory_space<vmem>>, %arg3: memref<8x1xf32, #tpu.memory_space<vmem>>, %arg4: memref<8x256xf32, #tpu.memory_space<vmem>>) attributes {dimension_semantics = [#tpu.dimension_semantics<parallel>], iteration_bounds = array<i64: 2>, scalar_prefetch = 0 : i64, scratch_operands = 0 : i64, tpu.core_type = #tpu.core_type<tc>, window_params = [{transform_indices = @transform_0, window_bounds = array<i64: 48, 256>}, {pipeline_mode = #tpu.pipeline_mode<synchronous>, transform_indices = @transform_1, window_bounds = array<i64: 8, 48>}, {pipeline_mode = #tpu.pipeline_mode<synchronous>, transform_indices = @transform_2, window_bounds = array<i64: 8, 1>}, {transform_indices = @transform_3, window_bounds = array<i64: 8, 256>}]} {
    %c0 = arith.constant 0 : index
    %c0_0 = arith.constant 0 : index
    %0 = vector.load %arg2[%c0, %c0_0] : memref<8x48xbf16, #tpu.memory_space<vmem>>, vector<8x48xbf16>
    %c0_1 = arith.constant 0 : index
    %c0_2 = arith.constant 0 : index
    %1 = vector.load %arg1[%c0_1, %c0_2] : memref<48x256xbf16, #tpu.memory_space<vmem>>, vector<48x256xbf16>
    %cst = arith.constant dense<0.000000e+00> : vector<8x256xf32>
    %2 = tpu.matmul %0, %1, %cst {dimension_numbers = #tpu.dot_dimension_numbers<[1], [0], [0], [1], [0, 0, 1, 1], [], []>} : vector<8x48xbf16>, vector<48x256xbf16>, vector<8x256xf32> -> vector<8x256xf32>
    %c0_3 = arith.constant 0 : index
    %c0_4 = arith.constant 0 : index
    %3 = vector.load %arg3[%c0_3, %c0_4] : memref<8x1xf32, #tpu.memory_space<vmem>>, vector<8x1xf32>
    %4 = vector.broadcast %3 : vector<8x1xf32> to vector<8x256xf32>
    %5 = arith.addf %2, %4 : vector<8x256xf32>
    %c0_5 = arith.constant 0 : index
    %c0_6 = arith.constant 0 : index
    %6 = vector.load %arg4[%c0_5, %c0_6] : memref<8x256xf32, #tpu.memory_space<vmem>>, vector<8x256xf32>
    tpu.vector_store %arg4[%c0_5, %c0_6], %5 {strides = array<i32>} : memref<8x256xf32, #tpu.memory_space<vmem>>, vector<8x256xf32>,
    return
  }
  func.func @transform_0(%arg0: i32) -> (i32, i32) {
    %c0_i32 = arith.constant 0 : i32
    %c0_i32_0 = arith.constant 0 : i32
    return %c0_i32, %arg0 : i32, i32
  }
  func.func @transform_1(%arg0: i32) -> (i32, i32) {
    %c0_i32 = arith.constant 0 : i32
    %c0_i32_0 = arith.constant 0 : i32
    %c0_i32_1 = arith.constant 0 : i32
    return %c0_i32, %c0_i32_0 : i32, i32
  }
  func.func @transform_2(%arg0: i32) -> (i32, i32) {
    %c0_i32 = arith.constant 0 : i32
    %c0_i32_0 = arith.constant 0 : i32
    %c0_i32_1 = arith.constant 0 : i32
    return %c0_i32, %c0_i32_0 : i32, i32
  }
  func.func @transform_3(%arg0: i32) -> (i32, i32) {
    %c0_i32 = arith.constant 0 : i32
    %c0_i32_0 = arith.constant 0 : i32
    return %c0_i32, %arg0 : i32, i32
  }
}

module attributes {stable_mosaic.version = 11 : i64} {
  func.func @_conv_mm_kernel(%arg0: i32, %arg1: memref<48x128xbf16, #tpu.memory_space<vmem>>, %arg2: memref<8x48xbf16, #tpu.memory_space<vmem>>, %arg3: memref<8x1xf32, #tpu.memory_space<vmem>>, %arg4: memref<8x128xf32, #tpu.memory_space<vmem>>) attributes {dimension_semantics = [#tpu.dimension_semantics<parallel>], iteration_bounds = array<i64: 1>, scalar_prefetch = 0 : i64, scratch_operands = 0 : i64, tpu.core_type = #tpu.core_type<tc>, window_params = [{transform_indices = @transform_0, window_bounds = array<i64: 48, 128>}, {pipeline_mode = #tpu.pipeline_mode<synchronous>, transform_indices = @transform_1, window_bounds = array<i64: 8, 48>}, {pipeline_mode = #tpu.pipeline_mode<synchronous>, transform_indices = @transform_2, window_bounds = array<i64: 8, 1>}, {transform_indices = @transform_3, window_bounds = array<i64: 8, 128>}]} {
    %c0 = arith.constant 0 : index
    %c0_0 = arith.constant 0 : index
    %0 = vector.load %arg2[%c0, %c0_0] : memref<8x48xbf16, #tpu.memory_space<vmem>>, vector<8x48xbf16>
    %c0_1 = arith.constant 0 : index
    %c0_2 = arith.constant 0 : index
    %1 = vector.load %arg1[%c0_1, %c0_2] : memref<48x128xbf16, #tpu.memory_space<vmem>>, vector<48x128xbf16>
    %cst = arith.constant dense<0.000000e+00> : vector<8x128xf32>
    %2 = tpu.matmul %0, %1, %cst {dimension_numbers = #tpu.dot_dimension_numbers<[1], [0], [0], [1], [0, 0, 1, 1], [], []>} : vector<8x48xbf16>, vector<48x128xbf16>, vector<8x128xf32> -> vector<8x128xf32>
    %c0_3 = arith.constant 0 : index
    %c0_4 = arith.constant 0 : index
    %3 = vector.load %arg3[%c0_3, %c0_4] : memref<8x1xf32, #tpu.memory_space<vmem>>, vector<8x1xf32>
    %4 = vector.broadcast %3 : vector<8x1xf32> to vector<8x128xf32>
    %5 = arith.addf %2, %4 : vector<8x128xf32>
    %c0_5 = arith.constant 0 : index
    %c0_6 = arith.constant 0 : index
    %6 = vector.load %arg4[%c0_5, %c0_6] : memref<8x128xf32, #tpu.memory_space<vmem>>, vector<8x128xf32>
    tpu.vector_store %arg4[%c0_5, %c0_6], %5 {strides = array<i32>} : memref<8x128xf32, #tpu.memory_space<vmem>>, vector<8x128xf32>,
    return
  }
  func.func @transform_0(%arg0: i32) -> (i32, i32) {
    %c0_i32 = arith.constant 0 : i32
    %c0_i32_0 = arith.constant 0 : i32
    return %c0_i32, %arg0 : i32, i32
  }
  func.func @transform_1(%arg0: i32) -> (i32, i32) {
    %c0_i32 = arith.constant 0 : i32
    %c0_i32_0 = arith.constant 0 : i32
    %c0_i32_1 = arith.constant 0 : i32
    return %c0_i32, %c0_i32_0 : i32, i32
  }
  func.func @transform_2(%arg0: i32) -> (i32, i32) {
    %c0_i32 = arith.constant 0 : i32
    %c0_i32_0 = arith.constant 0 : i32
    %c0_i32_1 = arith.constant 0 : i32
    return %c0_i32, %c0_i32_0 : i32, i32
  }
  func.func @transform_3(%arg0: i32) -> (i32, i32) {
    %c0_i32 = arith.constant 0 : i32
    %c0_i32_0 = arith.constant 0 : i32
    return %c0_i32, %arg0 : i32, i32
  }
}

</mosaic_0001>

<llo_original>
// kernel: _octconv_aftup_forward.2
$region0: #{_octconv_aftup_forward.2}
  #allocation0 [shape = 'u32[]', space=smem, size = 0x4, offset = 0x4, fixed_abs, tag = 'smem constant byte address 0x4 - core index']
  #allocation1 [shape = 'u32[72,128]{1,0:T(1,128)}', space=vmem, size = 0x9000, scoped, tag = 'internal scratch']
  %s0 = inlined_call_operand.vmem [shape: bf16[48,512], index: 0, kind: input, shape index: {}]
  %s1 = inlined_call_operand.vmem [shape: bf16[8,48], index: 1, kind: input, shape index: {}]
  %s2 = inlined_call_operand.vmem [shape: f32[8,1], index: 2, kind: input, shape index: {}]
  %s3 = inlined_call_operand.vmem [shape: f32[8,512], index: 3, kind: output, shape index: {}]
  %s4 = sld [smem:[#allocation0]]
  $region83: #{_octconv_aftup_forward.2} parent=0
    _
  %s6 = ssub.s32 1, %s4
  %s7 = scalar_select 0, %s6, %s4
  $region1: #{_octconv_aftup_forward.2} parent=0
    #allocation2 [shape = 'u8[49152]{0}', space=vmem, size = 0xc000, scoped, tag = 'input window, operand 0']
    loop: start=0, step=1, limit=4
    $region2: #{_octconv_aftup_forward.2} parent=1 // loop_pre_header
      _
    $region3: #{_octconv_aftup_forward.2} parent=1 // loop_header
      %s9 = sphi 0, %s13
      %p10 = scmp.ge.s32.totalorder %s9, 4
      %s19 = sphi 0, %s21
      %s22 = sphi 0, %s19
      %s23 = sphi 0, %s22
      %s39 = sphi 0, %s23
      %s43 = sphi 0, %s43
      %s45 = sphi 0, %s43
      %s46 = sphi 0, %s45
      %s60 = sphi 0, %s46
      %s64 = sphi 0, %s64
      %s66 = sphi 0, %s64
      %s67 = sphi 0, %s66
      %s81 = sphi 0, %s67
      %s87 = sphi 0, %s89
      %s90 = sphi 0, %s87
      %s91 = sphi 0, %s90
      %s107 = sphi 0, %s91
    $region4: #{_octconv_aftup_forward.2} parent=1 // loop_header_branch
      %12 = sbr.rel (%p10) target = $region8
    $region5: #{_octconv_aftup_forward.2} parent=1 // loop_body
      %s14 = ssub.s32 %s9, 1
      %s15 = ssub.s32 %s9, 2
      %s16 = sadd.s32 %s9, 1
      %s17 = ssub.s32 %s9, %s16
      %p18 = scmp.eq.s32.totalorder %s17, 0
      %s20 = sadd.s32 %s19, 1
      %s21 = scalar_select %p18, %s19, %s20
      %p24 = pneg %p18
      %p25 = scmp.eq.s32.totalorder %s9, 1
      %p26 = por %p24, %p25
      %p27 = scmp.ne.s32.totalorder %s19, %s22
      %p28 = scmp.eq.s32.totalorder %s9, 0
      %p29 = por %p27, %p28
      %p30 = scmp.ne.s32.totalorder %s19, %s22
      %p31 = scmp.eq.s32.totalorder %s14, 1
      %p32 = por %p30, %p31
      %p33 = scmp.ne.s32.totalorder %s22, %s23
      %p34 = scmp.eq.s32.totalorder %s14, 0
      %p35 = por %p33, %p34
      %p36 = scmp.ne.s32.totalorder %s22, %s23
      %p37 = scmp.eq.s32.totalorder %s15, 1
      %p38 = por %p36, %p37
      %p40 = scmp.ne.s32.totalorder %s23, %s39
      %p41 = scmp.eq.s32.totalorder %s15, 0
      %p42 = por %p40, %p41
      %s44 = sadd.s32 %s43, 1
      %p47 = scmp.eq.s32.totalorder %s9, 1
      %p48 = scmp.ne.s32.totalorder %s43, %s45
      %p49 = scmp.eq.s32.totalorder %s9, 0
      %p50 = por %p48, %p49
      %p51 = scmp.ne.s32.totalorder %s43, %s45
      %p52 = scmp.eq.s32.totalorder %s14, 1
      %p53 = por %p51, %p52
      %p54 = scmp.ne.s32.totalorder %s45, %s46
      %p55 = scmp.eq.s32.totalorder %s14, 0
      %p56 = por %p54, %p55
      %p57 = scmp.ne.s32.totalorder %s45, %s46
      %p58 = scmp.eq.s32.totalorder %s15, 1
      %p59 = por %p57, %p58
      %p61 = scmp.ne.s32.totalorder %s46, %s60
      %p62 = scmp.eq.s32.totalorder %s15, 0
      %p63 = por %p61, %p62
      %s65 = sadd.s32 %s64, 1
      %p68 = scmp.eq.s32.totalorder %s9, 1
      %p69 = scmp.ne.s32.totalorder %s64, %s66
      %p70 = scmp.eq.s32.totalorder %s9, 0
      %p71 = por %p69, %p70
      %p72 = scmp.ne.s32.totalorder %s64, %s66
      %p73 = scmp.eq.s32.totalorder %s14, 1
      %p74 = por %p72, %p73
      %p75 = scmp.ne.s32.totalorder %s66, %s67
      %p76 = scmp.eq.s32.totalorder %s14, 0
      %p77 = por %p75, %p76
      %p78 = scmp.ne.s32.totalorder %s66, %s67
      %p79 = scmp.eq.s32.totalorder %s15, 1
      %p80 = por %p78, %p79
      %p82 = scmp.ne.s32.totalorder %s67, %s81
      %p83 = scmp.eq.s32.totalorder %s15, 0
      %p84 = por %p82, %p83
      %s85 = ssub.s32 %s9, %s16
      %p86 = scmp.eq.s32.totalorder %s85, 0
      %s88 = sadd.s32 %s87, 1
      %s89 = scalar_select %p86, %s87, %s88
      %p92 = pneg %p86
      %p93 = scmp.eq.s32.totalorder %s9, 1
      %p94 = por %p92, %p93
      %p95 = scmp.ne.s32.totalorder %s87, %s90
      %p96 = scmp.eq.s32.totalorder %s9, 0
      %p97 = por %p95, %p96
      %p98 = scmp.ne.s32.totalorder %s87, %s90
      %p99 = scmp.eq.s32.totalorder %s14, 1
      %p100 = por %p98, %p99
      %p101 = scmp.ne.s32.totalorder %s90, %s91
      %p102 = scmp.eq.s32.totalorder %s14, 0
      %p103 = por %p101, %p102
      %p104 = scmp.ne.s32.totalorder %s90, %s91
      %p105 = scmp.eq.s32.totalorder %s15, 1
      %p106 = por %p104, %p105
      %p108 = scmp.ne.s32.totalorder %s91, %s107
      %p109 = scmp.eq.s32.totalorder %s15, 0
      %p110 = por %p108, %p109
      %p111 = scmp.le.s32.totalorder 1, %s9
      %p112 = scmp.lt.s32.totalorder %s9, 3
      %p113 = pnand %p111, %p112
      %p114 = pneg %p113
      // Predicated region
      $region9: #{_octconv_aftup_forward.2} parent=5 // pred_check
        _
      $region10: #{_octconv_aftup_forward.2} parent=5 // pred_check_branch
        %116 = sbr.rel (%p113) target = $region12
      $region11: #{_octconv_aftup_forward.2} parent=5 // pred_region
        %s117 = ssub.s32 %s9, 1
        // Predicated region
        $region13: #{_octconv_aftup_forward.2} parent=11 // pred_check
          %p118 = pneg %p56
        $region14: #{_octconv_aftup_forward.2} parent=11 // pred_check_branch
          %120 = sbr.rel (%p118) target = $region16
        $region15: #{_octconv_aftup_forward.2} parent=11 // pred_region
          _
        $region16: #{_octconv_aftup_forward.2} parent=11 // pred_fallthru
          _
        // Predicated region
        $region17: #{_octconv_aftup_forward.2} parent=11 // pred_check
          %p121 = pneg %p77
        $region18: #{_octconv_aftup_forward.2} parent=11 // pred_check_branch
          %123 = sbr.rel (%p121) target = $region20
        $region19: #{_octconv_aftup_forward.2} parent=11 // pred_region
          _
        $region20: #{_octconv_aftup_forward.2} parent=11 // pred_fallthru
          _
      $region12: #{_octconv_aftup_forward.2} parent=5 // pred_fallthru
        _
      %p124 = scmp.lt.s32.totalorder %s9, 2
      // Predicated region
      $region21: #{_octconv_aftup_forward.2} parent=5 // pred_check
        %p125 = pneg %p124
      $region22: #{_octconv_aftup_forward.2} parent=5 // pred_check_branch
        %127 = sbr.rel (%p125) target = $region24
      $region23: #{_octconv_aftup_forward.2} parent=5 // pred_region
        // Predicated region
        $region25: #{_octconv_aftup_forward.2} parent=23 // pred_check
          %p128 = pneg %p29
        $region26: #{_octconv_aftup_forward.2} parent=23 // pred_check_branch
          %130 = sbr.rel (%p128) target = $region28
        $region27: #{_octconv_aftup_forward.2} parent=23 // pred_region
          %s131 = sand.u32 %s19, 1
          %s132 = sand.u32 %s19, 1
          %s133 = smul.addr %s132, 48
          %s134 = scalar_lea.vmem [#allocation2], %s133
          %s135 = smul.u32 2, %s9
          %s136 = smul.addr %s135, 4
          %s137 = scalar_lea.vmem %s0, %s136
          // Predicated region
          $region29: #{_octconv_aftup_forward.2} parent=27 // pred_check
            _
          $region30: #{_octconv_aftup_forward.2} parent=27 // pred_check_branch
            %139 = sbr.rel (0) target = $region32
          $region31: #{_octconv_aftup_forward.2} parent=27 // pred_region
            // Predicated region
            $region33: #{_octconv_aftup_forward.2} parent=31 // pred_check
              _
            $region34: #{_octconv_aftup_forward.2} parent=31 // pred_check_branch
              %141 = sbr.rel (0) target = $region36
            $region35: #{_octconv_aftup_forward.2} parent=31 // pred_region
              // Predicated region
              $region48: #{_octconv_aftup_forward.2} parent=35 // pred_check
                _
              $region49: #{_octconv_aftup_forward.2} parent=35 // pred_check_branch
                %167 = sbr.rel (0) target = $region51
              $region50: #{_octconv_aftup_forward.2} parent=35 // pred_region
                loop: start=0, step=1, limit=1
                $region52: #{_octconv_aftup_forward.2} parent=50 // loop_pre_header
                  _
                $region53: #{_octconv_aftup_forward.2} parent=50 // loop_header
                  %s169 = sphi 0, %s173
                  %p170 = scmp.ge.s32.totalorder %s169, 1
                  %s174 = sphi %s137, %s137
                  %s175 = sphi %s134, %s134
                $region54: #{_octconv_aftup_forward.2} parent=50 // loop_header_branch
                  %172 = sbr.rel (%p170) target = $region58
                $region55: #{_octconv_aftup_forward.2} parent=50 // loop_body
                  %v176 = vld [vmem:[%s174] sm:$0xff]
                  %177 = vst [vmem:[%s175] sm:$0xff] %v176
                  %v178 = vld [vmem:[%s174 + $0x10] sm:$0xff]
                  %179 = vst [vmem:[%s175 + $0x8] sm:$0xff] %v178
                  %v180 = vld [vmem:[%s174 + $0x20] sm:$0xff]
                  %181 = vst [vmem:[%s175 + $0x10] sm:$0xff] %v180
                  %v182 = vld [vmem:[%s174 + $0x30] sm:$0xff]
                  %183 = vst [vmem:[%s175 + $0x18] sm:$0xff] %v182
                  %v184 = vld [vmem:[%s174 + $0x40] sm:$0xff]
                  %185 = vst [vmem:[%s175 + $0x20] sm:$0xff] %v184
                  %v186 = vld [vmem:[%s174 + $0x50] sm:$0xff]
                  %187 = vst [vmem:[%s175 + $0x28] sm:$0xff] %v186
                $region56: #{_octconv_aftup_forward.2} parent=50 // loop_footer
                  %s173 = sadd.s32 1, %s169
                $region57: #{_octconv_aftup_forward.2} parent=50 // loop_footer_branch
                  %168 = sbr.rel target = $region53
                $region58: #{_octconv_aftup_forward.2} parent=50 // loop_exit
                  _
              $region51: #{_octconv_aftup_forward.2} parent=35 // pred_fallthru
                _
              // Predicated region
              $region59: #{_octconv_aftup_forward.2} parent=35 // pred_check
                _
              $region60: #{_octconv_aftup_forward.2} parent=35 // pred_check_branch
                %189 = sbr.rel target = $region62
              $region61: #{_octconv_aftup_forward.2} parent=35 // pred_region
                _
              $region62: #{_octconv_aftup_forward.2} parent=35 // pred_fallthru
                _
            $region36: #{_octconv_aftup_forward.2} parent=31 // pred_fallthru
              _
            // Predicated region
            $region37: #{_octconv_aftup_forward.2} parent=31 // pred_check
              _
            $region38: #{_octconv_aftup_forward.2} parent=31 // pred_check_branch
              %143 = sbr.rel target = $region40
            $region39: #{_octconv_aftup_forward.2} parent=31 // pred_region
              %s145 = ssub.s32 256, 1
              loop: start=0, step=1, limit=1
              $region41: #{_octconv_aftup_forward.2} parent=39 // loop_pre_header
                _
              $region42: #{_octconv_aftup_forward.2} parent=39 // loop_header
                %s147 = sphi 0, %s151
                %p148 = scmp.ge.s32.totalorder %s147, 1
                %s152 = sphi %s137, %s137
                %s153 = sphi %s134, %s134
              $region43: #{_octconv_aftup_forward.2} parent=39 // loop_header_branch
                %150 = sbr.rel (%p148) target = $region47
              $region44: #{_octconv_aftup_forward.2} parent=39 // loop_body
                %v154 = vld [vmem:[%s152] sm:%s145]
                %155 = vst [vmem:[%s153] sm:%s145] %v154
                %v156 = vld [vmem:[%s152 + $0x10] sm:%s145]
                %157 = vst [vmem:[%s153 + $0x8] sm:%s145] %v156
                %v158 = vld [vmem:[%s152 + $0x20] sm:%s145]
                %159 = vst [vmem:[%s153 + $0x10] sm:%s145] %v158
                %v160 = vld [vmem:[%s152 + $0x30] sm:%s145]
                %161 = vst [vmem:[%s153 + $0x18] sm:%s145] %v160
                %v162 = vld [vmem:[%s152 + $0x40] sm:%s145]
                %163 = vst [vmem:[%s153 + $0x20] sm:%s145] %v162
                %v164 = vld [vmem:[%s152 + $0x50] sm:%s145]
                %165 = vst [vmem:[%s153 + $0x28] sm:%s145] %v164
              $region45: #{_octconv_aftup_forward.2} parent=39 // loop_footer
                %s151 = sadd.s32 1, %s147
              $region46: #{_octconv_aftup_forward.2} parent=39 // loop_footer_branch
                %146 = sbr.rel target = $region42
              $region47: #{_octconv_aftup_forward.2} parent=39 // loop_exit
                _
            $region40: #{_octconv_aftup_forward.2} parent=31 // pred_fallthru
              _
          $region32: #{_octconv_aftup_forward.2} parent=27 // pred_fallthru
            _
          %190 = vnop
        $region28: #{_octconv_aftup_forward.2} parent=23 // pred_fallthru
          _
      $region24: #{_octconv_aftup_forward.2} parent=5 // pred_fallthru
        _
      %p191 = scmp.le.s32.totalorder 1, %s9
      %p192 = scmp.lt.s32.totalorder %s9, 3
      %p193 = pnand %p191, %p192
      %p194 = pneg %p193
      // Predicated region
      $region63: #{_octconv_aftup_forward.2} parent=5 // pred_check
        _
      $region64: #{_octconv_aftup_forward.2} parent=5 // pred_check_branch
        %196 = sbr.rel (%p193) target = $region66
      $region65: #{_octconv_aftup_forward.2} parent=5 // pred_region
        %s197 = ssub.s32 %s9, 1
        %s198 = sand.u32 %s22, 1
        %s199 = sand.u32 %s22, 1
        %s200 = smul.addr %s199, 48
        %s201 = scalar_lea.vmem [#allocation2], %s200
        // Predicated region
        $region67: #{_octconv_aftup_forward.2} parent=65 // pred_check
          %p202 = pneg %p35
        $region68: #{_octconv_aftup_forward.2} parent=65 // pred_check_branch
          %204 = sbr.rel (%p202) target = $region70
        $region69: #{_octconv_aftup_forward.2} parent=65 // pred_region
          _
        $region70: #{_octconv_aftup_forward.2} parent=65 // pred_fallthru
          _
        %s205 = sand.u32 %s22, 1
        %s206 = sand.u32 %s22, 1
        %s207 = smul.addr %s206, 48
        %s208 = scalar_lea.vmem [#allocation2], %s207
        %p209 = pneg %p35
        %p210 = pneg %p32
        %p211 = pneg %p56
        %p212 = pneg %p53
        %p213 = pneg %p77
        %p214 = pneg %p74
        %p215 = pneg %p103
        %p216 = pneg %p100
        %s217 = smul.u32 2, %s14
        %p218 = scmp.lt.s32.totalorder %s217, 3
        %s219 = scalar_select %p218, %s217, 3
        %s220 = smul.addr %s219, 8
        %s221 = scalar_lea.vmem %s3, %s220
        %s222 = smul.u32 2, %s14
        %s223 = smul.u32 2, %s14
        %p224 = scmp.lt.s32.totalorder %s223, 3
        %s225 = scalar_select %p224, %s223, 3
        %s226 = smul.addr %s225, 8
        %s227 = scalar_lea.vmem %s3, %s226
        %s228 = smul.u32 2, %s14
        %v230 = vld [vmem:[%s1] sm:$0xf]
        %v231 = vld [vmem:[%s201] sm:$0xff]
        %v232 = vld [vmem:[%s201 + $0x8] sm:$0xff]
        %v233 = vld [vmem:[%s201 + $0x10] sm:$0xff]
        %v234 = vld [vmem:[%s201 + $0x18] sm:$0xff]
        %v235 = vld [vmem:[%s201 + $0x20] sm:$0xff]
        %v236 = vld [vmem:[%s201 + $0x28] sm:$0xff]
        %v237 = vld [vmem:[%s2] sm:$0xff]
        %239 = vset.pattern.permute.xlu0 0
        %240 = vperm.xlu0 %239, %v237
        %v241 = vpop.permute.xlu0 %240
        %v249 = vunpack.c.l.b16 %v231
        %v250 = vunpack.c.h.b16 %v231
        %v251 = vunpack.c.l.b16 %v232
        %v252 = vunpack.c.h.b16 %v232
        %v253 = vunpack.c.l.b16 %v233
        %v254 = vunpack.c.h.b16 %v233
        %v255 = vunpack.c.l.b16 %v234
        %v256 = vunpack.c.h.b16 %v234
        %v257 = vunpack.c.l.b16 %v235
        %v258 = vunpack.c.h.b16 %v235
        %v259 = vunpack.c.l.b16 %v236
        %v260 = vunpack.c.h.b16 %v236
        %v261 = vpack.c.b16 %v251, %v249
        %v262 = vpack.c.b16 %v252, %v250
        %v263 = vpack.c.b16 %v255, %v253
        %v264 = vpack.c.b16 %v256, %v254
        %v265 = vpack.c.b16 %v259, %v257
        %v266 = vpack.c.b16 %v260, %v258
        %vm273 = vcmask 392192
        %v275 = vsel %vm273, %v230, 0
        %277 = vmatpush.bf16.msra.mxu0 0
        %278 = vmatpush.bf16.msra.mxu0 0
        %279 = vmatpush.bf16.msra.mxu0 0
        %280 = vmatpush.bf16.msra.mxu0 0
        %281 = vmatpush.bf16.msra.mxu0 0
        %282 = vmatpush.bf16.msra.mxu0 %v265
        %283 = vmatpush.bf16.msra.mxu0 %v263
        %284 = vmatpush.bf16.msra.mxu0 %v261
        %285 = vmatmul.bf16.gmra.mxu0 %v275
        %v286 = vpop.f32.mrf.mxu0
        %v287 = vadd.f32 %v241, %v286
        %v288 = vpop.f32.mrf.mxu0
        %289 = vdwg.mxu0
        %290 = vmatpush.bf16.msra.mxu0 0
        %291 = vmatpush.bf16.msra.mxu0 0
        %292 = vmatpush.bf16.msra.mxu0 0
        %293 = vmatpush.bf16.msra.mxu0 0
        %294 = vmatpush.bf16.msra.mxu0 0
        %295 = vmatpush.bf16.msra.mxu0 %v266
        %296 = vmatpush.bf16.msra.mxu0 %v264
        %297 = vmatpush.bf16.msra.mxu0 %v262
        %298 = vmatmul.bf16.gmra.mxu0 %v275
        %v299 = vpop.f32.mrf.mxu0
        %v300 = vadd.f32 %v241, %v299
        %v301 = vpop.f32.mrf.mxu0
        %302 = vdwg.mxu0
        %303 = vst [vmem:[%s227] sm:$0xff] %v287
        %304 = vst [vmem:[%s227 + $0x8] sm:$0xff] %v300
        %s305 = smul.u32 2, %s14
        %p306 = scmp.lt.s32.totalorder %s305, 3
        %s307 = scalar_select %p306, %s305, 3
        %s308 = smul.addr %s307, 8
        %s309 = scalar_lea.vmem %s3, %s308
        // Predicated region
        $region71: #{_octconv_aftup_forward.2} parent=65 // pred_check
          %p310 = pneg %p100
        $region72: #{_octconv_aftup_forward.2} parent=65 // pred_check_branch
          %312 = sbr.rel (%p310) target = $region74
        $region73: #{_octconv_aftup_forward.2} parent=65 // pred_region
          %s313 = smul.u32 2, %s14
        $region74: #{_octconv_aftup_forward.2} parent=65 // pred_fallthru
          _
      $region66: #{_octconv_aftup_forward.2} parent=5 // pred_fallthru
        _
      %p314 = scmp.le.s32.totalorder 2, %s9
      // Predicated region
      $region75: #{_octconv_aftup_forward.2} parent=5 // pred_check
        %p315 = pneg %p314
      $region76: #{_octconv_aftup_forward.2} parent=5 // pred_check_branch
        %317 = sbr.rel (%p315) target = $region78
      $region77: #{_octconv_aftup_forward.2} parent=5 // pred_region
        %s318 = ssub.s32 %s9, 2
        // Predicated region
        $region79: #{_octconv_aftup_forward.2} parent=77 // pred_check
          %p319 = pneg %p106
        $region80: #{_octconv_aftup_forward.2} parent=77 // pred_check_branch
          %321 = sbr.rel (%p319) target = $region82
        $region81: #{_octconv_aftup_forward.2} parent=77 // pred_region
          %s322 = smul.u32 2, %s15
          %p323 = scmp.lt.s32.totalorder %s322, 3
          %s324 = scalar_select %p323, %s322, 3
          %s325 = smul.addr %s324, 8
          %s326 = scalar_lea.vmem %s3, %s325
        $region82: #{_octconv_aftup_forward.2} parent=77 // pred_fallthru
          _
      $region78: #{_octconv_aftup_forward.2} parent=5 // pred_fallthru
        _
    $region6: #{_octconv_aftup_forward.2} parent=1 // loop_footer
      %s13 = sadd.s32 1, %s9
    $region7: #{_octconv_aftup_forward.2} parent=1 // loop_footer_branch
      %8 = sbr.rel target = $region3
    $region8: #{_octconv_aftup_forward.2} parent=1 // loop_exit
      _

// kernel: _octconv_aftup_forward.3
$region0: #{_octconv_aftup_forward.3}
  #allocation0 [shape = 'u32[]', space=smem, size = 0x4, offset = 0x4, fixed_abs, tag = 'smem constant byte address 0x4 - core index']
  #allocation1 [shape = 'u32[72,128]{1,0:T(1,128)}', space=vmem, size = 0x9000, scoped, tag = 'internal scratch']
  %s0 = inlined_call_operand.vmem [shape: bf16[48,128], index: 0, kind: input, shape index: {}]
  %s1 = inlined_call_operand.vmem [shape: bf16[8,48], index: 1, kind: input, shape index: {}]
  %s2 = inlined_call_operand.vmem [shape: f32[8,1], index: 2, kind: input, shape index: {}]
  %s3 = inlined_call_operand.vmem [shape: f32[8,128], index: 3, kind: output, shape index: {}]
  %s4 = sld [smem:[#allocation0]]
  $region22: #{_octconv_aftup_forward.3} parent=0
    _
  %s6 = ssub.s32 1, %s4
  %s7 = scalar_select 0, %s6, %s4
  // Predicated region
  $region2: #{_octconv_aftup_forward.3} parent=0 // pred_check
    _
  $region3: #{_octconv_aftup_forward.3} parent=0 // pred_check_branch
    %9 = sbr.rel (0) target = $region5
  $region4: #{_octconv_aftup_forward.3} parent=0 // pred_region
    _
  $region5: #{_octconv_aftup_forward.3} parent=0 // pred_fallthru
    _
  // Predicated region
  $region6: #{_octconv_aftup_forward.3} parent=0 // pred_check
    _
  $region7: #{_octconv_aftup_forward.3} parent=0 // pred_check_branch
    %11 = sbr.rel (0) target = $region9
  $region8: #{_octconv_aftup_forward.3} parent=0 // pred_region
    _
  $region9: #{_octconv_aftup_forward.3} parent=0 // pred_fallthru
    _
  // Predicated region
  $region10: #{_octconv_aftup_forward.3} parent=0 // pred_check
    _
  $region11: #{_octconv_aftup_forward.3} parent=0 // pred_check_branch
    %13 = sbr.rel (0) target = $region13
  $region12: #{_octconv_aftup_forward.3} parent=0 // pred_region
    _
  $region13: #{_octconv_aftup_forward.3} parent=0 // pred_fallthru
    _
  %v15 = vld [vmem:[%s1] sm:$0xf]
  %v16 = vld [vmem:[%s0] sm:$0xf]
  %v17 = vld [vmem:[%s0 + $0x4] sm:$0xf]
  %v18 = vld [vmem:[%s0 + $0x8] sm:$0xf]
  %v19 = vld [vmem:[%s0 + $0xc] sm:$0xf]
  %v20 = vld [vmem:[%s0 + $0x10] sm:$0xf]
  %v21 = vld [vmem:[%s0 + $0x14] sm:$0xf]
  %v22 = vld [vmem:[%s2] sm:$0xff]
  %24 = vset.pattern.permute.xlu0 0
  %25 = vperm.xlu0 %24, %v22
  %v26 = vpop.permute.xlu0 %25
  %v34 = vunpack.c.l.b16 %v16
  %v35 = vunpack.c.l.b16 %v17
  %v36 = vunpack.c.l.b16 %v18
  %v37 = vunpack.c.l.b16 %v19
  %v38 = vunpack.c.l.b16 %v20
  %v39 = vunpack.c.l.b16 %v21
  %v40 = vpack.c.b16 %v35, %v34
  %v41 = vpack.c.b16 %v37, %v36
  %v42 = vpack.c.b16 %v39, %v38
  %vm46 = vcmask 392192
  %v48 = vsel %vm46, %v15, 0
  %50 = vmatpush.bf16.msra.mxu0 0
  %51 = vmatpush.bf16.msra.mxu0 0
  %52 = vmatpush.bf16.msra.mxu0 0
  %53 = vmatpush.bf16.msra.mxu0 0
  %54 = vmatpush.bf16.msra.mxu0 0
  %55 = vmatpush.bf16.msra.mxu0 %v42
  %56 = vmatpush.bf16.msra.mxu0 %v41
  %57 = vmatpush.bf16.msra.mxu0 %v40
  %58 = vmatmul.bf16.gmra.mxu0 %v48
  %v59 = vpop.f32.mrf.mxu0
  %v60 = vadd.f32 %v26, %v59
  %v61 = vpop.f32.mrf.mxu0
  %62 = vdwg.mxu0
  %63 = vst [vmem:[%s3] sm:$0xff] %v60
  // Predicated region
  $region14: #{_octconv_aftup_forward.3} parent=0 // pred_check
    _
  $region15: #{_octconv_aftup_forward.3} parent=0 // pred_check_branch
    %65 = sbr.rel (0) target = $region17
  $region16: #{_octconv_aftup_forward.3} parent=0 // pred_region
    _
  $region17: #{_octconv_aftup_forward.3} parent=0 // pred_fallthru
    _
  // Predicated region
  $region18: #{_octconv_aftup_forward.3} parent=0 // pred_check
    _
  $region19: #{_octconv_aftup_forward.3} parent=0 // pred_check_branch
    %67 = sbr.rel (0) target = $region21
  $region20: #{_octconv_aftup_forward.3} parent=0 // pred_region
    _
  $region21: #{_octconv_aftup_forward.3} parent=0 // pred_fallthru
    _

</llo_original>
